<compile_context>
chip_gen: v7x
topology: tpu7x:2x2x1
jax: 0.10.0
libtpu: 0.0.40
codegen_flags: <defaults>
</compile_context>

<pallas_src>
import functools

import jax
import jax.numpy as jnp
from jax import lax
from jax.experimental import pallas as pl
from jax.experimental.pallas import tpu as pltpu

GAMMA = 1.5
ALPHA = 0.25

_LANES = 128
_SUBLANES = 8


def _device_kind():
    try:
        return jax.devices()[0].device_kind.lower()
    except Exception:
        return ""


def _num_parallel_cores():
    # 2 TensorCores per chip only on v7x-class parts; v5e/v6e are single-TC.
    k = _device_kind()
    return 2 if ("v7" in k or "7x" in k) else 1


def _bf16_math_ok():
    # v6e/v7x have bf16 VPU/EUP; v5e and older do not.
    k = _device_kind()
    return ("v6" in k) or ("v7" in k) or ("7x" in k)


def _focal_elementwise(x, y, gamma, alpha):
    """Per-element focal loss in f32 (used for lane tails, tiny inputs, testing)."""
    x = x.astype(jnp.float32)
    y = y.astype(jnp.float32)
    bce = jnp.maximum(x, 0.0) - x * y + jnp.log1p(jnp.exp(-jnp.abs(x)))
    p = jax.nn.sigmoid(x)
    p_t = y * p + (1.0 - y) * (1.0 - p)
    alpha_factor = y * alpha + (1.0 - y) * (1.0 - alpha)
    mod = jnp.power(1.0 - p_t, gamma)
    return bce * alpha_factor * mod


def _focal_loss_kernel(pred_ref, true_ref, out_ref, *, gamma, alpha, valid_rows,
                       block_rows, inner_steps, compute_dtype, row_ragged):
    p_idx = pl.program_id(0)   # per-TensorCore axis (size 1 on v5e/v6e)
    i = pl.program_id(1)       # sequential reduction axis

    @pl.when(i == 0)
    def _():
        out_ref[...] = jnp.zeros_like(out_ref)

    x = pred_ref[...].astype(compute_dtype)
    y = true_ref[...].astype(compute_dtype)

    # Single shared transcendental: e = exp(-|x|) feeds both BCE and sigmoid.
    e = jnp.exp(-jnp.abs(x))
    d = 1.0 + e

    if compute_dtype == jnp.float32:
        # Approximate EUP reciprocal + one Newton step (VPU) instead of a full divide.
        r = pl.reciprocal(d, approx=True)
        r = r * (2.0 - d * r)
    else:
        r = 1.0 / d            # bf16 path: let XLA/Mosaic pick the lowering

    # Numerically-stable BCE with logits (== torch BCEWithLogitsLoss, reduction='none').
    bce = jnp.maximum(x, 0.0) - x * y + jnp.log1p(e)

    # sigmoid(x) from the shared exp(-|x|).
    p = jnp.where(x >= 0.0, r, e * r)

    # z = 1 - p_t; clamp at 0 so sqrt never sees a tiny negative (cancellation).
    z = jnp.maximum(p + y - 2.0 * p * y, 0.0)

    # alpha_factor = y*alpha + (1-y)*(1-alpha); constants folded at trace time.
    alpha_factor = (1.0 - alpha) + y * (2.0 * alpha - 1.0)

    if gamma == 1.5:
        mod = z * jnp.sqrt(z)          # 1 EUP sqrt + 1 VPU mul
    elif gamma == 2.0:
        mod = z * z
    elif gamma == 1.0:
        mod = z
    else:
        mod = jnp.power(z, gamma)      # generic fallback

    loss = bce * (alpha_factor * mod)

    def accumulate(v):
        # Vreg-shaped partial sum: f32 accumulation, pure VPU vreg+vreg adds.
        partial = jnp.sum(v.astype(jnp.float32).reshape(-1, _SUBLANES, _LANES), axis=0)
        out_ref[...] += partial[None]

    if not row_ragged:
        accumulate(loss)
    else:
        # Masking only runs on boundary tiles (pl.when-gated), not every grid step.
        block_start = (p_idx * inner_steps + i) * block_rows
        in_bounds = block_start + block_rows <= valid_rows

        @pl.when(in_bounds)
        def _():
            accumulate(loss)

        @pl.when(jnp.logical_not(in_bounds))
        def _():
            riota = lax.broadcasted_iota(jnp.int32, (block_rows, _LANES), 0)
            keep = riota < (valid_rows - block_start)
            accumulate(jnp.where(keep, loss, jnp.zeros_like(loss)))


def focal_loss(pred, true, gamma=GAMMA, alpha=ALPHA, reduction="mean",
               block_rows=2048, compute_dtype=None):
    """pred, true: float arrays of identical shape (e.g. NCHW). Returns scalar focal loss."""
    assert pred.shape == true.shape
    total = pred.size
    if total == 0:
        return jnp.zeros((), jnp.float32)

    flat_p = pred.reshape(-1)              # free reshape (no copy) for contiguous inputs
    flat_t = true.reshape(-1)
    rows = total // _LANES
    lane_tail = total - rows * _LANES

    # Tiny inputs: a kernel buys nothing and creates degenerate (<8-row) tiles.
    if rows < _SUBLANES:
        s = jnp.sum(_focal_elementwise(flat_p, flat_t, gamma, alpha))
        return s if reduction == "sum" else s / total

    tail_sum = jnp.zeros((), jnp.float32)
    if lane_tail:
        # Lane-misaligned sizes: sum the (<128-element) tail with plain JAX, kernel on
        # the 128-aligned bulk.  No full-array jnp.pad.
        tail_sum = jnp.sum(_focal_elementwise(flat_p[rows * _LANES:],
                                              flat_t[rows * _LANES:], gamma, alpha))
        flat_p = flat_p[:rows * _LANES]
        flat_t = flat_t[:rows * _LANES]

    pred2d = flat_p.reshape(rows, _LANES)  # zero-copy when total % 128 == 0
    true2d = flat_t.reshape(rows, _LANES)

    if compute_dtype is None:
        if (pred.dtype == jnp.bfloat16 and true.dtype == jnp.bfloat16
                and _bf16_math_ok()):
            compute_dtype = jnp.bfloat16   # bf16 VPU/EUP math, f32 accumulation
        else:
            compute_dtype = jnp.float32

    # Per-generation core split (2 TCs only on v7x); never split tiny row counts.
    num_cores = _num_parallel_cores()
    if rows < 2 * 16:
        num_cores = 1

    per_core_rows = pl.cdiv(rows, num_cores)
    br = min(int(block_rows), per_core_rows)
    br = (br // 16) * 16 if br >= 16 else _SUBLANES     # 16-row aligned (bf16 packing)
    inner_steps = pl.cdiv(rows, num_cores * br)
    row_ragged = num_cores * inner_steps * br != rows
    last_block = pl.cdiv(rows, br) - 1

    if row_ragged:
        # Clamp so logically-OOB blocks never DMA past the array; their contribution
        # is masked to zero inside the kernel (row index check vs. valid_rows).
        def idx_map(p, i):
            return (jnp.minimum(p * inner_steps + i, last_block), 0)
    else:
        def idx_map(p, i):
            return (p * inner_steps + i, 0)

    kernel = functools.partial(
        _focal_loss_kernel, gamma=gamma, alpha=alpha, valid_rows=rows,
        block_rows=br, inner_steps=inner_steps, compute_dtype=compute_dtype,
        row_ragged=row_ragged)

    lead_sem = pltpu.CORE_PARALLEL if num_cores > 1 else pltpu.ARBITRARY

    partials = pl.pallas_call(
        kernel,
        out_shape=jax.ShapeDtypeStruct((num_cores, _SUBLANES, _LANES), jnp.float32),
        grid_spec=pltpu.PrefetchScalarGridSpec(
            num_scalar_prefetch=0,
            grid=(num_cores, inner_steps),
            in_specs=[pl.BlockSpec((br, _LANES), idx_map),
                      pl.BlockSpec((br, _LANES), idx_map)],
            out_specs=pl.BlockSpec((1, _SUBLANES, _LANES), lambda p, i: (p, 0, 0)),
        ),
        compiler_params=pltpu.CompilerParams(
            dimension_semantics=(lead_sem, pltpu.ARBITRARY),
            vmem_limit_bytes=48 * 1024 * 1024,   # cover 2 inputs x 2 buffers + temporaries
        ),
    )(pred2d, true2d)

    total_sum = jnp.sum(partials) + tail_sum
    if reduction == "sum":
        return total_sum
    # TODO(synk): reduction='none' (full element-wise loss map output) not implemented.
    return total_sum / total


def focal_loss_ref(pred, true, gamma=GAMMA, alpha=ALPHA):
    return jnp.mean(_focal_elementwise(pred.reshape(-1), true.reshape(-1), gamma, alpha))


if __name__ == "__main__":
    key = jax.random.PRNGKey(0)
    k1, k2, k3, k4, k5, k6, k7, k8 = jax.random.split(key, 8)

    # 1) Lane-aligned NCHW input (2*4*16*16 = 2048): zero-copy, unmasked fast path.
    pred = jax.random.normal(k1, (2, 4, 16, 16), dtype=jnp.float32)
    true = jax.random.bernoulli(k2, 0.3, (2, 4, 16, 16)).astype(jnp.float32)
    out = jax.block_until_ready(focal_loss(pred, true))
    ref = focal_loss_ref(pred, true)
    assert jnp.allclose(out, ref, rtol=1e-5, atol=1e-6), (out, ref)

    # 2) Ragged input (2*3*21*21 = 2646): kernel on the 128-aligned bulk with
    #    pl.when-gated row masking on the boundary tile + tiny plain-JAX lane tail.
    pred_r = jax.random.normal(k3, (2, 3, 21, 21), dtype=jnp.float32)
    true_r = jax.random.bernoulli(k4, 0.3, (2, 3, 21, 21)).astype(jnp.float32)
    out_r = jax.block_until_ready(focal_loss(pred_r, true_r))
    ref_r = focal_loss_ref(pred_r, true_r)
    assert jnp.allclose(out_r, ref_r, rtol=1e-5, atol=1e-6), (out_r, ref_r)

    # 3) Tiny input (2*3*7*5 = 210): plain-JAX fallback path.
    pred_t = jax.random.normal(k5, (2, 3, 7, 5), dtype=jnp.float32)
    true_t = jax.random.bernoulli(k6, 0.3, (2, 3, 7, 5)).astype(jnp.float32)
    out_t = jax.block_until_ready(focal_loss(pred_t, true_t))
    ref_t = focal_loss_ref(pred_t, true_t)
    assert jnp.allclose(out_t, ref_t, rtol=1e-5, atol=1e-6), (out_t, ref_t)

    # 4) bf16 inputs: bf16 elementwise math on v6e/v7x (f32 accumulation), f32 math on v5e.
    pred_b = jax.random.normal(k7, (2, 4, 16, 16), dtype=jnp.float32).astype(jnp.bfloat16)
    true_b = jax.random.bernoulli(k8, 0.3, (2, 4, 16, 16)).astype(jnp.bfloat16)
    out_b = jax.block_until_ready(focal_loss(pred_b, true_b))
    ref_b = focal_loss_ref(pred_b, true_b)
    assert jnp.allclose(out_b, ref_b, rtol=5e-2, atol=1e-3), (out_b, ref_b)

    print("KERNEL_OK")
</pallas_src>

<mosaic_0001>
module attributes {stable_mosaic.version = 11 : i64} {
  func.func @_focal_loss_kernel(%arg0: i32, %arg1: i32, %arg2: memref<16x128xf32, #tpu.memory_space<vmem>>, %arg3: memref<16x128xf32, #tpu.memory_space<vmem>>, %arg4: memref<1x8x128xf32, #tpu.memory_space<vmem>>) attributes {dimension_semantics = [#tpu.dimension_semantics<arbitrary>, #tpu.dimension_semantics<arbitrary>], iteration_bounds = array<i64: 1, 1>, scalar_prefetch = 0 : i64, scratch_operands = 0 : i64, tpu.core_type = #tpu.core_type<tc>, window_params = [{transform_indices = @transform_0, window_bounds = array<i64: 16, 128>}, {transform_indices = @transform_1, window_bounds = array<i64: 16, 128>}, {transform_indices = @transform_2, window_bounds = array<i64: 1, 8, 128>}]} {
    %c0_i32 = arith.constant 0 : i32
    %0 = arith.cmpi eq, %arg1, %c0_i32 : i32
    %1 = arith.extui %0 : i1 to i32
    %c0_i32_0 = arith.constant 0 : i32
    %2 = arith.cmpi ne, %1, %c0_i32_0 : i32
    scf.if %2 {
      %cst_19 = arith.constant 0.000000e+00 : f32
      %47 = vector.broadcast %cst_19 : f32 to vector<1x8x128xf32>
      %c0_20 = arith.constant 0 : index
      %c0_21 = arith.constant 0 : index
      %c0_22 = arith.constant 0 : index
      %48 = vector.load %arg4[%c0_20, %c0_21, %c0_22] : memref<1x8x128xf32, #tpu.memory_space<vmem>>, vector<1x8x128xf32>
      tpu.vector_store %arg4[%c0_20, %c0_21, %c0_22], %47 {strides = array<i32>} : memref<1x8x128xf32, #tpu.memory_space<vmem>>, vector<1x8x128xf32>,
    } else {
    }
    %c0 = arith.constant 0 : index
    %c0_1 = arith.constant 0 : index
    %3 = vector.load %arg2[%c0, %c0_1] : memref<16x128xf32, #tpu.memory_space<vmem>>, vector<16x128xf32>
    %c0_2 = arith.constant 0 : index
    %c0_3 = arith.constant 0 : index
    %4 = vector.load %arg3[%c0_2, %c0_3] : memref<16x128xf32, #tpu.memory_space<vmem>>, vector<16x128xf32>
    %5 = math.absf %3 : vector<16x128xf32>
    %cst = arith.constant 0.000000e+00 : f32
    %6 = vector.broadcast %cst : f32 to vector<16x128xf32>
    %7 = arith.subf %6, %5 : vector<16x128xf32>
    %8 = math.exp %7 : vector<16x128xf32>
    %cst_4 = arith.constant 1.000000e+00 : f32
    %9 = vector.broadcast %cst_4 : f32 to vector<16x128xf32>
    %10 = arith.addf %9, %8 : vector<16x128xf32>
    %11 = tpu.reciprocal %10 {approx = true} : vector<16x128xf32> -> vector<16x128xf32>
    %12 = arith.mulf %10, %11 : vector<16x128xf32>
    %cst_5 = arith.constant 2.000000e+00 : f32
    %13 = vector.broadcast %cst_5 : f32 to vector<16x128xf32>
    %14 = arith.subf %13, %12 : vector<16x128xf32>
    %15 = arith.mulf %11, %14 : vector<16x128xf32>
    %cst_6 = arith.constant 0.000000e+00 : f32
    %16 = vector.broadcast %cst_6 : f32 to vector<16x128xf32>
    %17 = arith.maximumf %3, %16 : vector<16x128xf32>
    %18 = arith.mulf %3, %4 : vector<16x128xf32>
    %19 = arith.subf %17, %18 : vector<16x128xf32>
    %20 = math.log1p %8 : vector<16x128xf32>
    %21 = arith.addf %19, %20 : vector<16x128xf32>
    %cst_7 = arith.constant 0.000000e+00 : f32
    %22 = vector.broadcast %cst_7 : f32 to vector<16x128xf32>
    %23 = arith.cmpf oge, %3, %22 : vector<16x128xf32>
    %24 = arith.mulf %8, %15 : vector<16x128xf32>
    %25 = arith.select %23, %15, %24 : vector<16x128xi1>, vector<16x128xf32>
    %26 = arith.addf %25, %4 : vector<16x128xf32>
    %cst_8 = arith.constant 2.000000e+00 : f32
    %27 = vector.broadcast %cst_8 : f32 to vector<16x128xf32>
    %28 = arith.mulf %27, %25 : vector<16x128xf32>
    %29 = arith.mulf %28, %4 : vector<16x128xf32>
    %30 = arith.subf %26, %29 : vector<16x128xf32>
    %cst_9 = arith.constant 0.000000e+00 : f32
    %31 = vector.broadcast %cst_9 : f32 to vector<16x128xf32>
    %32 = arith.maximumf %30, %31 : vector<16x128xf32>
    %cst_10 = arith.constant -5.000000e-01 : f32
    %33 = vector.broadcast %cst_10 : f32 to vector<16x128xf32>
    %34 = arith.mulf %4, %33 : vector<16x128xf32>
    %cst_11 = arith.constant 7.500000e-01 : f32
    %35 = vector.broadcast %cst_11 : f32 to vector<16x128xf32>
    %36 = arith.addf %35, %34 : vector<16x128xf32>
    %37 = math.sqrt %32 : vector<16x128xf32>
    %38 = arith.mulf %32, %37 : vector<16x128xf32>
    %39 = arith.mulf %36, %38 : vector<16x128xf32>
    %40 = arith.mulf %21, %39 : vector<16x128xf32>
    %41 = vector.shape_cast %40 : vector<16x128xf32> to vector<2x8x128xf32>
    %cst_12 = arith.constant dense<0.000000e+00> : vector<8x128xf32>
    %42 = vector.multi_reduction <add>, %41, %cst_12 [0] : vector<2x8x128xf32> to vector<8x128xf32>
    %c0_13 = arith.constant 0 : index
    %c0_14 = arith.constant 0 : index
    %c0_15 = arith.constant 0 : index
    %43 = vector.load %arg4[%c0_13, %c0_14, %c0_15] : memref<1x8x128xf32, #tpu.memory_space<vmem>>, vector<1x8x128xf32>
    %44 = vector.shape_cast %42 : vector<8x128xf32> to vector<1x8x128xf32>
    %45 = arith.addf %43, %44 : vector<1x8x128xf32>
    %c0_16 = arith.constant 0 : index
    %c0_17 = arith.constant 0 : index
    %c0_18 = arith.constant 0 : index
    %46 = vector.load %arg4[%c0_16, %c0_17, %c0_18] : memref<1x8x128xf32, #tpu.memory_space<vmem>>, vector<1x8x128xf32>
    tpu.vector_store %arg4[%c0_16, %c0_17, %c0_18], %45 {strides = array<i32>} : memref<1x8x128xf32, #tpu.memory_space<vmem>>, vector<1x8x128xf32>,
    return
  }
  func.func @transform_0(%arg0: i32, %arg1: i32) -> (i32, i32) {
    %c1_i32 = arith.constant 1 : i32
    %0 = arith.muli %arg0, %c1_i32 : i32
    %1 = arith.addi %0, %arg1 : i32
    %c0_i32 = arith.constant 0 : i32
    %c0_i32_0 = arith.constant 0 : i32
    return %1, %c0_i32 : i32, i32
  }
  func.func @transform_1(%arg0: i32, %arg1: i32) -> (i32, i32) {
    %c1_i32 = arith.constant 1 : i32
    %0 = arith.muli %arg0, %c1_i32 : i32
    %1 = arith.addi %0, %arg1 : i32
    %c0_i32 = arith.constant 0 : i32
    %c0_i32_0 = arith.constant 0 : i32
    return %1, %c0_i32 : i32, i32
  }
  func.func @transform_2(%arg0: i32, %arg1: i32) -> (i32, i32, i32) {
    %c0_i32 = arith.constant 0 : i32
    %c0_i32_0 = arith.constant 0 : i32
    %c0_i32_1 = arith.constant 0 : i32
    return %arg0, %c0_i32, %c0_i32_0 : i32, i32, i32
  }
}

</mosaic_0001>

<llo_original>
// kernel: tpu_custom_call.1
$region0: #{tpu_custom_call.1}
  #allocation0 [shape = 'u32[]', space=smem, size = 0x4, offset = 0x4, fixed_abs, tag = 'smem constant byte address 0x4 - core index']
  #allocation1 [shape = 'u32[144,128]{1,0:T(1,128)}', space=vmem, size = 0x12000, scoped, tag = 'internal scratch']
  %s0 = inlined_call_operand.hbm [shape: f32[16,128], index: 0, kind: input, shape index: {}]
  %s1 = inlined_call_operand.hbm [shape: f32[16,128], index: 1, kind: input, shape index: {}]
  %s2 = inlined_call_operand.hbm [shape: f32[1,8,128], index: 2, kind: output, shape index: {}]
  %s3 = sld [smem:[#allocation0]]
  $region30: #{tpu_custom_call.1} parent=0
    _
  %s5 = ssub.s32 1, %s3
  %s6 = scalar_select 0, %s5, %s3
  $region1: #{tpu_custom_call.1} parent=0
    #allocation2 [shape = 'u8[8192]{0}', space=vmem, size = 0x2000, scoped, tag = 'input window, operand 0, single buffered']
    #allocation3 [shape = 's32[1]{0}', space=sflag, size = 0x4, scoped, tag = 'scoped memory for tpu_custom_call.1']
    #allocation4 [shape = 's32[1]{0}', space=sflag, size = 0x4, scoped, tag = 'scoped memory for tpu_custom_call.1']
    #allocation5 [shape = 'u8[8192]{0}', space=vmem, size = 0x2000, scoped, tag = 'input window, operand 1, single buffered']
    #allocation6 [shape = 's32[1]{0}', space=sflag, size = 0x4, scoped, tag = 'scoped memory for tpu_custom_call.1']
    #allocation7 [shape = 'u8[4096]{0}', space=vmem, size = 0x1000, scoped, tag = 'output window, operand 0, single buffered']
    %7 = vsyncpa [#allocation3], 0
    %8 = vsyncpa [#allocation6], 0
    %9 = vsyncpa [#allocation4], 0
    // Predicated region
    $region2: #{tpu_custom_call.1} parent=1 // pred_check
      _
    $region3: #{tpu_custom_call.1} parent=1 // pred_check_branch
      %11 = sbr.rel (0) target = $region5
    $region4: #{tpu_custom_call.1} parent=1 // pred_region
      %s12 = sadd.s32 0, 0
      %s13 = smul.u32 2, %s12
      %s15 = ssub.s32 256, 256
      %16 = vsyncadd [#allocation3], %s15
      %s17 = smul.addr %s13, 128
      %s18 = scalar_lea.hbm %s0, %s17
      %s19 = sshll.u32 [#allocation2], 4
      %s20 = int_to_ptr.vmem [resolvable:$true] %s19
      %25 = dma.hbm_to_vmem [thread:$0]  %s18, 256, %s20, [#allocation3], 128, 128, 8
    $region5: #{tpu_custom_call.1} parent=1 // pred_fallthru
      _
    // Predicated region
    $region6: #{tpu_custom_call.1} parent=1 // pred_check
      _
    $region7: #{tpu_custom_call.1} parent=1 // pred_check_branch
      %27 = sbr.rel (0) target = $region9
    $region8: #{tpu_custom_call.1} parent=1 // pred_region
      %s28 = sadd.s32 0, 0
      %s29 = smul.u32 2, %s28
      %s31 = ssub.s32 256, 256
      %32 = vsyncadd [#allocation6], %s31
      %s33 = smul.addr %s29, 128
      %s34 = scalar_lea.hbm %s1, %s33
      %s35 = sshll.u32 [#allocation5], 4
      %s36 = int_to_ptr.vmem [resolvable:$true] %s35
      %41 = dma.hbm_to_vmem [thread:$0]  %s34, 256, %s36, [#allocation6], 128, 128, 8
    $region9: #{tpu_custom_call.1} parent=1 // pred_fallthru
      _
    // Predicated region
    $region10: #{tpu_custom_call.1} parent=1 // pred_check
      _
    $region11: #{tpu_custom_call.1} parent=1 // pred_check_branch
      %43 = sbr.rel (0) target = $region13
    $region12: #{tpu_custom_call.1} parent=1 // pred_region
      %44 = dma.done [#allocation3], 256
    $region13: #{tpu_custom_call.1} parent=1 // pred_fallthru
      _
    // Predicated region
    $region14: #{tpu_custom_call.1} parent=1 // pred_check
      _
    $region15: #{tpu_custom_call.1} parent=1 // pred_check_branch
      %46 = sbr.rel (0) target = $region17
    $region16: #{tpu_custom_call.1} parent=1 // pred_region
      %47 = dma.done [#allocation6], 256
    $region17: #{tpu_custom_call.1} parent=1 // pred_fallthru
      _
    %s48 = sadd.s32 0, 0
    %s49 = smul.u32 2, %s48
    %s50 = sadd.s32 0, 0
    %s51 = smul.u32 2, %s50
    %p52 = scmp.eq.s32.totalorder 0, 0
    // Predicated region
    $region18: #{tpu_custom_call.1} parent=1 // pred_check
      %p53 = pneg %p52
    $region19: #{tpu_custom_call.1} parent=1 // pred_check_branch
      %55 = sbr.rel (%p53) target = $region21
    $region20: #{tpu_custom_call.1} parent=1 // pred_region
      %56 = vst [vmem:[#allocation7] sm:$0xff] 0.0
    $region21: #{tpu_custom_call.1} parent=1 // pred_fallthru
      _
    %v57 = vld [vmem:[#allocation2] sm:$0xff]
    %v58 = vld [vmem:[#allocation2 + $0x8] sm:$0xff]
    %v59 = vld [vmem:[#allocation5] sm:$0xff]
    %v60 = vld [vmem:[#allocation5 + $0x8] sm:$0xff]
    %v61 = vand.u32 2147483647, %v57
    %v62 = vand.u32 2147483647, %v58
    %v63 = vsub.f32 0.0, %v61
    %v64 = vsub.f32 0.0, %v62
    %v65 = vmul.f32 %v63, 1.442695
    %v66 = vpow.pop %v65
    %v67 = vmul.f32 %v64, 1.442695
    %v68 = vpow.pop %v67
    %v69 = vadd.f32 %v66, 1.0
    %v70 = vadd.f32 %v68, 1.0
    %v71 = vrcp.pop %v69
    %v72 = vrcp.pop %v70
    %v73 = vmul.f32 %v69, %v71
    %v74 = vmul.f32 %v70, %v72
    %v75 = vsub.f32 2.0, %v73
    %v76 = vsub.f32 2.0, %v74
    %v77 = vmul.f32 %v71, %v75
    %v78 = vmul.f32 %v72, %v76
    %v79 = vmax.f32 %v57, 0.0
    %v80 = vmax.f32 %v58, 0.0
    %v81 = vmul.f32 %v57, %v59
    %v82 = vmul.f32 %v58, %v60
    %v83 = vsub.f32 %v79, %v81
    %v84 = vsub.f32 %v80, %v82
    %v85 = vadd.f32 %v66, 1.0
    %v86 = vlog2.pop %v85
    %v87 = vmul.f32 %v86, 0.6931472
    %v88 = vmul.f32 -0.5, %v66
    %v89 = vadd.f32 %v88, 1.0
    %v90 = vmul.f32 %v89, %v66
    %v91 = vand.u32 2147483647, %v66
    %vm92 = vcmp.lt.f32.partialorder %v91, 0.0004427343
    %v93 = vsel %vm92, %v90, %v87
    %v94 = vadd.f32 %v68, 1.0
    %v95 = vlog2.pop %v94
    %v96 = vmul.f32 %v95, 0.6931472
    %v97 = vmul.f32 -0.5, %v68
    %v98 = vadd.f32 %v97, 1.0
    %v99 = vmul.f32 %v98, %v68
    %v100 = vand.u32 2147483647, %v68
    %vm101 = vcmp.lt.f32.partialorder %v100, 0.0004427343
    %v102 = vsel %vm101, %v99, %v96
    %v103 = vadd.f32 %v83, %v93
    %v104 = vadd.f32 %v84, %v102
    %vm105 = vcmp.ge.f32.partialorder %v57, 0.0
    %vm106 = vcmp.ge.f32.partialorder %v58, 0.0
    %v107 = vmul.f32 %v66, %v77
    %v108 = vmul.f32 %v68, %v78
    %v109 = vsel %vm105, %v77, %v107
    %v110 = vsel %vm106, %v78, %v108
    %v111 = vadd.f32 %v109, %v59
    %v112 = vadd.f32 %v110, %v60
    %v113 = vmul.f32 %v109, 2.0
    %v114 = vmul.f32 %v110, 2.0
    %v115 = vmul.f32 %v113, %v59
    %v116 = vmul.f32 %v114, %v60
    %v117 = vsub.f32 %v111, %v115
    %v118 = vsub.f32 %v112, %v116
    %v119 = vmax.f32 %v117, 0.0
    %v120 = vmax.f32 %v118, 0.0
    %v121 = vmul.f32 %v59, -0.5
    %v122 = vmul.f32 %v60, -0.5
    %v123 = vadd.f32 %v121, 0.75
    %v124 = vadd.f32 %v122, 0.75
    %v125 = vrsqrt.pop %v119
    %v126 = vmul.f32 %v119, %v125
    %vm127 = vcmp.eq.f32.partialorder %v119, inf
    %v128 = vsel %vm127, %v119, %v126
    %vm129 = vcmp.eq.f32.partialorder %v119, 0.0
    %v130 = vand.u32 %v119, 2147483648
    %v131 = vsel %vm129, %v130, %v128
    %v132 = vrsqrt.pop %v120
    %v133 = vmul.f32 %v120, %v132
    %vm134 = vcmp.eq.f32.partialorder %v120, inf
    %v135 = vsel %vm134, %v120, %v133
    %vm136 = vcmp.eq.f32.partialorder %v120, 0.0
    %v137 = vand.u32 %v120, 2147483648
    %v138 = vsel %vm136, %v137, %v135
    %v139 = vmul.f32 %v119, %v131
    %v140 = vmul.f32 %v120, %v138
    %v141 = vmul.f32 %v123, %v139
    %v142 = vmul.f32 %v124, %v140
    %v143 = vmul.f32 %v103, %v141
    %v144 = vmul.f32 %v104, %v142
    %v145 = vadd.f32 %v143, %v144
    %v146 = vld [vmem:[#allocation7] sm:$0xff]
    %v147 = vadd.f32 %v146, %v145
    %148 = vst [vmem:[#allocation7] sm:$0xff] %v147
    // Predicated region
    $region22: #{tpu_custom_call.1} parent=1 // pred_check
      _
    $region23: #{tpu_custom_call.1} parent=1 // pred_check_branch
      %150 = sbr.rel (0) target = $region25
    $region24: #{tpu_custom_call.1} parent=1 // pred_region
      %s152 = ssub.s32 128, 128
      %153 = vsyncadd [#allocation4], %s152
      %s155 = sshll.u32 [#allocation7], 4
      %s156 = int_to_ptr.vmem [resolvable:$true] %s155
      %158 = dma.vmem_to_hbm [thread:$0]  %s156, 128, %s2, [#allocation4]
    $region25: #{tpu_custom_call.1} parent=1 // pred_fallthru
      _
    // Predicated region
    $region26: #{tpu_custom_call.1} parent=1 // pred_check
      _
    $region27: #{tpu_custom_call.1} parent=1 // pred_check_branch
      %160 = sbr.rel (0) target = $region29
    $region28: #{tpu_custom_call.1} parent=1 // pred_region
      %161 = dma.done [#allocation4], 128
    $region29: #{tpu_custom_call.1} parent=1 // pred_fallthru
      _
    %162 = vsyncpa [#allocation3], 1
    %163 = vsyncpa [#allocation6], 1
    %164 = vsyncpa [#allocation4], 1

</llo_original>
